<compile_context>
chip_gen: v7x
topology: tpu7x:2x2x1
jax: 0.10.0
libtpu: 0.0.40
codegen_flags: <defaults>
</compile_context>

<pallas_src>
import jax
import jax.numpy as jnp
from jax.experimental import pallas as pl
from jax.experimental.pallas import tpu as pltpu


_VMEM_LIMIT_BYTES = 32 * 1024 * 1024     # explicit scoped-VMEM limit (safe on v5e/v6e/v7x)
_TILE_BUDGET_BYTES = 8 * 1024 * 1024     # budget for the 4 double-buffered x/out tiles
_TARGET_BLOCK_BYTES = 1 * 1024 * 1024    # aim for ~1 MiB per (bn, C, T) block
_MAX_BN = 32                             # cap on images packed per grid step (unroll bound)
_DEFAULT_MIN_PALLAS_BYTES = 256 * 1024   # below this, plain XLA beats kernel overhead


def _round_down(x, m):
    return (x // m) * m


# ----------------------------------------------------------------------------- kernels
def _pa_nchw_kernel(w_ref, x_ref, o_ref):
    # w_ref: (C, C)      conv weight [c_out, c_in], resident across the grid
    # x_ref: (bn, C, T)  batch of channel x spatial tiles (lane dim = spatial)
    # o_ref: (bn, C, T)
    w = w_ref[...]
    for b in range(x_ref.shape[0]):           # bn is static -> fully unrolled
        o_ref[b] = jnp.dot(
            w, x_ref[b], preferred_element_type=jnp.float32
        ).astype(o_ref.dtype)


def _pa_rows_kernel(x_ref, w_ref, o_ref):
    # x_ref: (TM, C); w_ref: (C, C) [c_out, c_in]; o_ref: (TM, C)
    # out[m, o] = sum_c x[m, c] * W[o, c]  == x @ W.T, contracted natively on the MXU
    o_ref[...] = jax.lax.dot_general(
        x_ref[...], w_ref[...],
        dimension_numbers=(((1,), (1,)), ((), ())),
        preferred_element_type=jnp.float32,
    ).astype(o_ref.dtype)


# ------------------------------------------------------------------------- tile sizing
def _choose_hw_tile(C, HW, itemsize):
    # 2 x-tiles + 2 out-tiles (double-buffered) of C*T*itemsize must fit the budget.
    cap = _TILE_BUDGET_BYTES // (4 * C * itemsize)
    cap = max(128, _round_down(cap, 128))
    if HW <= cap:
        return HW                              # full-extent spatial block (layout-legal)
    return min(cap, _round_down(HW, 128))      # multiple of 128; last block may be partial


def _choose_batch_tile(N, C, T, itemsize):
    # Pack enough images per grid step to amortize the ~0.35us/step overhead,
    # while keeping the 4 double-buffered blocks within the VMEM budget.
    per_image = max(1, C * T * itemsize)
    bn = max(1, _TARGET_BLOCK_BYTES // per_image)
    bn = int(min(bn, N, _MAX_BN))
    while bn > 1 and 4 * bn * per_image > _TILE_BUDGET_BYTES:
        bn -= 1
    return bn


def _choose_row_tile(M, C, itemsize):
    cap = _TILE_BUDGET_BYTES // (4 * max(C, 1) * itemsize)
    cap = max(8, min(2048, _round_down(cap, 8)))
    if M <= cap:
        return M                               # single full-extent row block
    return cap                                 # multiple of 8; last block may be partial


# --------------------------------------------------------------------------- wrappers
def _pa_conv_pallas(x4, w2d):
    """x4: (N, C, H, W) -> (N, C*H*W); NCHW-native (no transposes around the kernel)."""
    N, C, H, W = x4.shape
    HW = H * W
    x3 = x4.reshape(N, C, HW)                  # free reshape: NCHW is contiguous
    T = _choose_hw_tile(C, HW, x4.dtype.itemsize)
    bn = _choose_batch_tile(N, C, T, x4.dtype.itemsize)
    out3 = pl.pallas_call(
        _pa_nchw_kernel,
        out_shape=jax.ShapeDtypeStruct((N, C, HW), x4.dtype),
        grid=(pl.cdiv(N, bn), pl.cdiv(HW, T)),
        in_specs=[
            pl.BlockSpec((C, C), lambda n, j: (0, 0)),          # weight, resident
            pl.BlockSpec((bn, C, T), lambda n, j: (n, 0, j)),   # packed image / spatial tile
        ],
        out_specs=pl.BlockSpec((bn, C, T), lambda n, j: (n, 0, j)),
        compiler_params=pltpu.CompilerParams(
            dimension_semantics=("parallel", "parallel"),
            vmem_limit_bytes=_VMEM_LIMIT_BYTES,
        ),
    )(w2d, x3)
    return out3.reshape(N, C * HW)


def _pa_rows_pallas(x2d, w2d):
    """x2d: (M, C) -> (M, C) == x @ W.T; row-tiled, no HBM pad/slice copies."""
    M, C = x2d.shape
    tm = _choose_row_tile(M, C, x2d.dtype.itemsize)
    return pl.pallas_call(
        _pa_rows_kernel,
        out_shape=jax.ShapeDtypeStruct((M, C), x2d.dtype),
        grid=(pl.cdiv(M, tm),),
        in_specs=[
            pl.BlockSpec((tm, C), lambda i: (i, 0)),
            pl.BlockSpec((C, C), lambda i: (0, 0)),             # weight, resident
        ],
        out_specs=pl.BlockSpec((tm, C), lambda i: (i, 0)),
        compiler_params=pltpu.CompilerParams(
            dimension_semantics=("parallel",),
            vmem_limit_bytes=_VMEM_LIMIT_BYTES,
        ),
    )(x2d, w2d)


def pa_forward(x, weight, beta_weight=None, *, min_pallas_bytes=_DEFAULT_MIN_PALLAS_BYTES):
    """Forward pass of `pa`.

    x:      (N, C) or (N, C, H, W)
    weight: (C, C, 1, 1) conv weight [out, in, 1, 1]
    beta_weight is unused in the reference forward (kept only for parity).
    Returns (N, C*H*W), matching PyTorch's conv2d(1x1).flatten(1) ordering/dtype.
    """
    C = weight.shape[0]
    w2d = weight.reshape(C, C).astype(x.dtype)

    if x.ndim == 2:
        N, H, W = x.shape[0], 1, 1
    else:
        N, _, H, W = x.shape
    HW = H * W

    # Tiny problems: Pallas launch + per-step overhead dominate; let plain XLA do it.
    if x.size * x.dtype.itemsize < min_pallas_bytes:
        if x.ndim == 2:
            return jnp.einsum("nc,oc->no", x, w2d)
        return jnp.einsum("oc,nchw->nohw", w2d, x).reshape(N, C * HW)

    if x.ndim == 2 or HW == 1:
        return _pa_rows_pallas(x.reshape(N, C), w2d)

    return _pa_conv_pallas(x, w2d)


if __name__ == "__main__":
    key = jax.random.PRNGKey(0)
    k_x, k_w, k_x2 = jax.random.split(key, 3)

    N, C, H, W = 2, 32, 16, 16   # feat_dim = 32
    x = jax.random.normal(k_x, (N, C, H, W), dtype=jnp.float32)
    # Module __init__ uses ones; random values give a more meaningful numeric check
    # (shapes match the module exactly).
    weight = jax.random.normal(k_w, (C, C, 1, 1), dtype=jnp.float32)
    beta_weight = jnp.ones((1, C), dtype=jnp.float32)   # unused in forward (parity)

    # 4-D path, forced through the Pallas NCHW kernel.
    out = jax.block_until_ready(pa_forward(x, weight, beta_weight, min_pallas_bytes=0))
    ref = jnp.einsum("oc,nchw->nohw", weight.reshape(C, C), x).reshape(N, C * H * W)
    assert out.shape == (N, C * H * W)
    assert jnp.allclose(out, ref, atol=1e-4, rtol=1e-4)

    # 2-D feature-input branch, forced through the Pallas rows kernel.
    x2 = jax.random.normal(k_x2, (4, C), dtype=jnp.float32)
    out2 = jax.block_until_ready(pa_forward(x2, weight, beta_weight, min_pallas_bytes=0))
    ref2 = x2 @ weight.reshape(C, C).T
    assert out2.shape == (4, C)
    assert jnp.allclose(out2, ref2, atol=1e-4, rtol=1e-4)

    # Default dispatch (this demo size is tiny -> plain-XLA fallback) must also match.
    out3 = jax.block_until_ready(pa_forward(x, weight, beta_weight))
    assert jnp.allclose(out3, ref, atol=1e-4, rtol=1e-4)

    print("KERNEL_OK")
</pallas_src>

<mosaic_0001>
module attributes {stable_mosaic.version = 11 : i64} {
  func.func @_pa_nchw_kernel(%arg0: i32, %arg1: i32, %arg2: memref<32x32xf32, #tpu.memory_space<vmem>>, %arg3: memref<2x32x256xf32, #tpu.memory_space<vmem>>, %arg4: memref<2x32x256xf32, #tpu.memory_space<vmem>>) attributes {dimension_semantics = [#tpu.dimension_semantics<parallel>, #tpu.dimension_semantics<parallel>], iteration_bounds = array<i64: 1, 1>, scalar_prefetch = 0 : i64, scratch_operands = 0 : i64, tpu.core_type = #tpu.core_type<tc>, window_params = [{pipeline_mode = #tpu.pipeline_mode<synchronous>, transform_indices = @transform_0, window_bounds = array<i64: 32, 32>}, {transform_indices = @transform_1, window_bounds = array<i64: 2, 32, 256>}, {transform_indices = @transform_2, window_bounds = array<i64: 2, 32, 256>}]} {
    %c0 = arith.constant 0 : index
    %c0_0 = arith.constant 0 : index
    %0 = vector.load %arg2[%c0, %c0_0] : memref<32x32xf32, #tpu.memory_space<vmem>>, vector<32x32xf32>
    %c0_1 = arith.constant 0 : index
    %c0_2 = arith.constant 0 : index
    %c0_3 = arith.constant 0 : index
    %1 = vector.load %arg3[%c0_1, %c0_2, %c0_3] : memref<2x32x256xf32, #tpu.memory_space<vmem>>, vector<1x32x256xf32>
    %2 = vector.shape_cast %1 : vector<1x32x256xf32> to vector<32x256xf32>
    %cst = arith.constant dense<0.000000e+00> : vector<32x256xf32>
    %3 = tpu.matmul %0, %2, %cst {dimension_numbers = #tpu.dot_dimension_numbers<[1], [0], [0], [1], [0, 0, 1, 1], [], []>} : vector<32x32xf32>, vector<32x256xf32>, vector<32x256xf32> -> vector<32x256xf32>
    %c0_4 = arith.constant 0 : index
    %c0_5 = arith.constant 0 : index
    %c0_6 = arith.constant 0 : index
    %4 = vector.load %arg4[%c0_4, %c0_5, %c0_6] : memref<2x32x256xf32, #tpu.memory_space<vmem>>, vector<1x32x256xf32>
    %5 = vector.shape_cast %4 : vector<1x32x256xf32> to vector<32x256xf32>
    %6 = vector.shape_cast %3 : vector<32x256xf32> to vector<1x32x256xf32>
    tpu.vector_store %arg4[%c0_4, %c0_5, %c0_6], %6 {strides = array<i32>} : memref<2x32x256xf32, #tpu.memory_space<vmem>>, vector<1x32x256xf32>,
    %c1 = arith.constant 1 : index
    %c0_7 = arith.constant 0 : index
    %c0_8 = arith.constant 0 : index
    %7 = vector.load %arg3[%c1, %c0_7, %c0_8] : memref<2x32x256xf32, #tpu.memory_space<vmem>>, vector<1x32x256xf32>
    %8 = vector.shape_cast %7 : vector<1x32x256xf32> to vector<32x256xf32>
    %cst_9 = arith.constant dense<0.000000e+00> : vector<32x256xf32>
    %9 = tpu.matmul %0, %8, %cst_9 {dimension_numbers = #tpu.dot_dimension_numbers<[1], [0], [0], [1], [0, 0, 1, 1], [], []>} : vector<32x32xf32>, vector<32x256xf32>, vector<32x256xf32> -> vector<32x256xf32>
    %c1_10 = arith.constant 1 : index
    %c0_11 = arith.constant 0 : index
    %c0_12 = arith.constant 0 : index
    %10 = vector.load %arg4[%c1_10, %c0_11, %c0_12] : memref<2x32x256xf32, #tpu.memory_space<vmem>>, vector<1x32x256xf32>
    %11 = vector.shape_cast %10 : vector<1x32x256xf32> to vector<32x256xf32>
    %12 = vector.shape_cast %9 : vector<32x256xf32> to vector<1x32x256xf32>
    tpu.vector_store %arg4[%c1_10, %c0_11, %c0_12], %12 {strides = array<i32>} : memref<2x32x256xf32, #tpu.memory_space<vmem>>, vector<1x32x256xf32>,
    return
  }
  func.func @transform_0(%arg0: i32, %arg1: i32) -> (i32, i32) {
    %c0_i32 = arith.constant 0 : i32
    %c0_i32_0 = arith.constant 0 : i32
    %c0_i32_1 = arith.constant 0 : i32
    return %c0_i32, %c0_i32_0 : i32, i32
  }
  func.func @transform_1(%arg0: i32, %arg1: i32) -> (i32, i32, i32) {
    %c0_i32 = arith.constant 0 : i32
    %c0_i32_0 = arith.constant 0 : i32
    return %arg0, %c0_i32, %arg1 : i32, i32, i32
  }
  func.func @transform_2(%arg0: i32, %arg1: i32) -> (i32, i32, i32) {
    %c0_i32 = arith.constant 0 : i32
    %c0_i32_0 = arith.constant 0 : i32
    return %arg0, %c0_i32, %arg1 : i32, i32, i32
  }
}

</mosaic_0001>

<llo_original>
// kernel: tpu_custom_call.1
$region0: #{tpu_custom_call.1}
  #allocation0 [shape = 'u32[]', space=smem, size = 0x4, offset = 0x4, fixed_abs, tag = 'smem constant byte address 0x4 - core index']
  #allocation1 [shape = 'u32[144,128]{1,0:T(1,128)}', space=vmem, size = 0x12000, scoped, tag = 'internal scratch']
  %s0 = inlined_call_operand.hbm [shape: f32[32,32], index: 0, kind: input, shape index: {}]
  %s1 = inlined_call_operand.hbm [shape: f32[2,32,256], index: 1, kind: input, shape index: {}]
  %s2 = inlined_call_operand.hbm [shape: f32[2,32,256], index: 2, kind: output, shape index: {}]
  %s3 = sld [smem:[#allocation0]]
  $region26: #{tpu_custom_call.1} parent=0
    _
  %s5 = ssub.s32 1, %s3
  %s6 = scalar_select 0, %s5, %s3
  $region1: #{tpu_custom_call.1} parent=0
    #allocation2 [shape = 'u8[16384]{0}', space=vmem, size = 0x4000, scoped, tag = 'input window, operand 0, single buffered']
    #allocation3 [shape = 's32[1]{0}', space=sflag, size = 0x4, scoped, tag = 'scoped memory for tpu_custom_call.1']
    #allocation4 [shape = 's32[1]{0}', space=sflag, size = 0x4, scoped, tag = 'scoped memory for tpu_custom_call.1']
    #allocation5 [shape = 'u8[65536]{0}', space=vmem, size = 0x10000, scoped, tag = 'input window, operand 1, single buffered']
    #allocation6 [shape = 's32[1]{0}', space=sflag, size = 0x4, scoped, tag = 'scoped memory for tpu_custom_call.1']
    #allocation7 [shape = 'u8[65536]{0}', space=vmem, size = 0x10000, scoped, tag = 'output window, operand 0, single buffered']
    %7 = vsyncpa [#allocation3], 0
    %8 = vsyncpa [#allocation6], 0
    %9 = vsyncpa [#allocation4], 0
    // Predicated region
    $region2: #{tpu_custom_call.1} parent=1 // pred_check
      _
    $region3: #{tpu_custom_call.1} parent=1 // pred_check_branch
      %11 = sbr.rel (0) target = $region5
    $region4: #{tpu_custom_call.1} parent=1 // pred_region
      %s13 = ssub.s32 512, 512
      %14 = vsyncadd [#allocation3], %s13
      %s15 = sshll.u32 [#allocation2], 4
      %s16 = int_to_ptr.vmem [resolvable:$true] %s15
      %21 = dma.hbm_to_vmem [thread:$0]  %s0, 512, %s16, [#allocation3], 128, 128, 8
    $region5: #{tpu_custom_call.1} parent=1 // pred_fallthru
      _
    // Predicated region
    $region6: #{tpu_custom_call.1} parent=1 // pred_check
      _
    $region7: #{tpu_custom_call.1} parent=1 // pred_check_branch
      %23 = sbr.rel (0) target = $region9
    $region8: #{tpu_custom_call.1} parent=1 // pred_region
      %s25 = ssub.s32 2048, 2048
      %26 = vsyncadd [#allocation6], %s25
      %s27 = sshll.u32 [#allocation5], 4
      %s28 = int_to_ptr.vmem [resolvable:$true] %s27
      %33 = dma.hbm_to_vmem [thread:$0]  %s1, 2048, %s28, [#allocation6], 256, 256, 16
    $region9: #{tpu_custom_call.1} parent=1 // pred_fallthru
      _
    // Predicated region
    $region10: #{tpu_custom_call.1} parent=1 // pred_check
      _
    $region11: #{tpu_custom_call.1} parent=1 // pred_check_branch
      %35 = sbr.rel (0) target = $region13
    $region12: #{tpu_custom_call.1} parent=1 // pred_region
      %36 = dma.done [#allocation3], 512
    $region13: #{tpu_custom_call.1} parent=1 // pred_fallthru
      _
    // Predicated region
    $region14: #{tpu_custom_call.1} parent=1 // pred_check
      _
    $region15: #{tpu_custom_call.1} parent=1 // pred_check_branch
      %38 = sbr.rel (0) target = $region17
    $region16: #{tpu_custom_call.1} parent=1 // pred_region
      %39 = dma.done [#allocation6], 2048
    $region17: #{tpu_custom_call.1} parent=1 // pred_fallthru
      _
    %v40 = vld [vmem:[#allocation2] sm:$0xff]
    %v41 = vld [vmem:[#allocation2 + $0x8] sm:$0xff]
    %v42 = vld [vmem:[#allocation2 + $0x10] sm:$0xff]
    %v43 = vld [vmem:[#allocation2 + $0x18] sm:$0xff]
    %v44 = vld [vmem:[#allocation5] sm:$0xff]
    %v45 = vld [vmem:[#allocation5 + $0x8] sm:$0xff]
    %v46 = vld [vmem:[#allocation5 + $0x10] sm:$0xff]
    %v47 = vld [vmem:[#allocation5 + $0x18] sm:$0xff]
    %v48 = vld [vmem:[#allocation5 + $0x20] sm:$0xff]
    %v49 = vld [vmem:[#allocation5 + $0x28] sm:$0xff]
    %v50 = vld [vmem:[#allocation5 + $0x30] sm:$0xff]
    %v51 = vld [vmem:[#allocation5 + $0x38] sm:$0xff]
    %vm52 = vcmask 261120
    %v54 = vsel %vm52, %v40, 0
    %v57 = vsel %vm52, %v41, 0
    %v60 = vsel %vm52, %v42, 0
    %v63 = vsel %vm52, %v43, 0
    %65 = vmatprep.subr.mxu0 %v45
    %66 = vmatpush1.msra.mxu0 %v44
    %67 = vmatprep.subr.mxu0 %v47
    %68 = vmatpush1.msra.mxu0 %v46
    %69 = vmatprep.subr.mxu0 %v49
    %70 = vmatpush1.msra.mxu0 %v48
    %71 = vmatprep.subr.mxu0 %v51
    %72 = vmatpush1.msra.mxu0 %v50
    %73 = vmatprep.subr.mxu0 0.0
    %74 = vmatpush1.msra.mxu0 0.0
    %75 = vmatprep.subr.mxu0 0.0
    %76 = vmatpush1.msra.mxu0 0.0
    %77 = vmatprep.subr.mxu0 0.0
    %78 = vmatpush1.msra.mxu0 0.0
    %79 = vmatprep.subr.mxu0 0.0
    %80 = vmatpush1.msra.mxu0 0.0
    %81 = vmatprep.subr.mxu0 0.0
    %82 = vmatpush1.msra.mxu0 0.0
    %83 = vmatprep.subr.mxu0 0.0
    %84 = vmatpush1.msra.mxu0 0.0
    %85 = vmatprep.subr.mxu0 0.0
    %86 = vmatpush1.msra.mxu0 0.0
    %87 = vmatprep.subr.mxu0 0.0
    %88 = vmatpush1.msra.mxu0 0.0
    %89 = vmatprep.subr.mxu0 0.0
    %90 = vmatpush1.msra.mxu0 0.0
    %91 = vmatprep.subr.mxu0 0.0
    %92 = vmatpush1.msra.mxu0 0.0
    %93 = vmatprep.subr.mxu0 0.0
    %94 = vmatpush1.msra.mxu0 0.0
    %95 = vmatprep.subr.mxu0 0.0
    %96 = vmatpush1.msra.mxu0 0.0
    %97 = vmatprep.subr.mxu0 0.0
    %98 = vmatpush1.msra.mxu0 0.0
    %99 = vmatprep.subr.mxu0 0.0
    %100 = vmatpush1.msra.mxu0 0.0
    %101 = vmatprep.subr.mxu0 0.0
    %102 = vmatpush1.msra.mxu0 0.0
    %103 = vmatprep.subr.mxu0 0.0
    %104 = vmatpush1.msra.mxu0 0.0
    %105 = vmatprep.subr.mxu0 0.0
    %106 = vmatpush1.msra.mxu0 0.0
    %107 = vmatprep.subr.mxu0 0.0
    %108 = vmatpush1.msra.mxu0 0.0
    %109 = vmatprep.subr.mxu0 0.0
    %110 = vmatpush1.msra.mxu0 0.0
    %111 = vmatprep.subr.mxu0 0.0
    %112 = vmatpush1.msra.mxu0 0.0
    %113 = vmatprep.subr.mxu0 0.0
    %114 = vmatpush1.msra.mxu0 0.0
    %115 = vmatprep.subr.mxu0 0.0
    %116 = vmatpush1.msra.mxu0 0.0
    %117 = vmatprep.subr.mxu0 0.0
    %118 = vmatpush1.msra.mxu0 0.0
    %119 = vmatprep.subr.mxu0 0.0
    %120 = vmatpush1.msra.mxu0 0.0
    %121 = vmatprep.subr.mxu0 0.0
    %122 = vmatpush1.msra.mxu0 0.0
    %123 = vmatprep.subr.mxu0 0.0
    %124 = vmatpush1.msra.mxu0 0.0
    %125 = vmatprep.subr.mxu0 0.0
    %126 = vmatpush1.msra.mxu0 0.0
    %127 = vmatprep.subr.mxu0 0.0
    %128 = vmatpush1.msra.mxu0 0.0
    %129 = vmatprep.mubr.f32.mxu0 0.0
    %130 = vmatmul.mubr.f32.gmra.mrb[0].mxu0 %v54
    %v131 = vpop.f32.mrb[0].mxu0
    %v132 = vadd.f32 0.0, %v131
    %v133 = vpop.f32.mrb[0].mxu0
    %v134 = vadd.f32 0.0, %v133
    %135 = vmatprep.mubr.f32.mxu0 0.0
    %136 = vmatmul.mubr.f32.gmra.mrb[0].mxu0 %v57
    %v137 = vpop.f32.mrb[0].mxu0
    %v138 = vadd.f32 0.0, %v137
    %v139 = vpop.f32.mrb[0].mxu0
    %v140 = vadd.f32 0.0, %v139
    %141 = vmatprep.mubr.f32.mxu0 0.0
    %142 = vmatmul.mubr.f32.gmra.mrb[0].mxu0 %v60
    %v143 = vpop.f32.mrb[0].mxu0
    %v144 = vadd.f32 0.0, %v143
    %v145 = vpop.f32.mrb[0].mxu0
    %v146 = vadd.f32 0.0, %v145
    %147 = vmatprep.mubr.f32.mxu0 0.0
    %148 = vmatmul.mubr.f32.gmra.mrb[0].mxu0 %v63
    %v149 = vpop.f32.mrb[0].mxu0
    %v150 = vadd.f32 0.0, %v149
    %v151 = vpop.f32.mrb[0].mxu0
    %v152 = vadd.f32 0.0, %v151
    %153 = vdwg.mxu0
    %154 = vst [vmem:[#allocation7] sm:$0xff] %v132
    %155 = vst [vmem:[#allocation7 + $0x8] sm:$0xff] %v134
    %156 = vst [vmem:[#allocation7 + $0x10] sm:$0xff] %v138
    %157 = vst [vmem:[#allocation7 + $0x18] sm:$0xff] %v140
    %158 = vst [vmem:[#allocation7 + $0x20] sm:$0xff] %v144
    %159 = vst [vmem:[#allocation7 + $0x28] sm:$0xff] %v146
    %160 = vst [vmem:[#allocation7 + $0x30] sm:$0xff] %v150
    %161 = vst [vmem:[#allocation7 + $0x38] sm:$0xff] %v152
    %s162 = scalar_lea.vmem [#allocation5], 64
    %v163 = vld [vmem:[%s162] sm:$0xff]
    %v164 = vld [vmem:[%s162 + $0x8] sm:$0xff]
    %v165 = vld [vmem:[%s162 + $0x10] sm:$0xff]
    %v166 = vld [vmem:[%s162 + $0x18] sm:$0xff]
    %v167 = vld [vmem:[%s162 + $0x20] sm:$0xff]
    %v168 = vld [vmem:[%s162 + $0x28] sm:$0xff]
    %v169 = vld [vmem:[%s162 + $0x30] sm:$0xff]
    %v170 = vld [vmem:[%s162 + $0x38] sm:$0xff]
    %171 = vmatprep.subr.mxu0 %v164
    %172 = vmatpush1.msra.mxu0 %v163
    %173 = vmatprep.subr.mxu0 %v166
    %174 = vmatpush1.msra.mxu0 %v165
    %175 = vmatprep.subr.mxu0 %v168
    %176 = vmatpush1.msra.mxu0 %v167
    %177 = vmatprep.subr.mxu0 %v170
    %178 = vmatpush1.msra.mxu0 %v169
    %179 = vmatprep.subr.mxu0 0.0
    %180 = vmatpush1.msra.mxu0 0.0
    %181 = vmatprep.subr.mxu0 0.0
    %182 = vmatpush1.msra.mxu0 0.0
    %183 = vmatprep.subr.mxu0 0.0
    %184 = vmatpush1.msra.mxu0 0.0
    %185 = vmatprep.subr.mxu0 0.0
    %186 = vmatpush1.msra.mxu0 0.0
    %187 = vmatprep.subr.mxu0 0.0
    %188 = vmatpush1.msra.mxu0 0.0
    %189 = vmatprep.subr.mxu0 0.0
    %190 = vmatpush1.msra.mxu0 0.0
    %191 = vmatprep.subr.mxu0 0.0
    %192 = vmatpush1.msra.mxu0 0.0
    %193 = vmatprep.subr.mxu0 0.0
    %194 = vmatpush1.msra.mxu0 0.0
    %195 = vmatprep.subr.mxu0 0.0
    %196 = vmatpush1.msra.mxu0 0.0
    %197 = vmatprep.subr.mxu0 0.0
    %198 = vmatpush1.msra.mxu0 0.0
    %199 = vmatprep.subr.mxu0 0.0
    %200 = vmatpush1.msra.mxu0 0.0
    %201 = vmatprep.subr.mxu0 0.0
    %202 = vmatpush1.msra.mxu0 0.0
    %203 = vmatprep.subr.mxu0 0.0
    %204 = vmatpush1.msra.mxu0 0.0
    %205 = vmatprep.subr.mxu0 0.0
    %206 = vmatpush1.msra.mxu0 0.0
    %207 = vmatprep.subr.mxu0 0.0
    %208 = vmatpush1.msra.mxu0 0.0
    %209 = vmatprep.subr.mxu0 0.0
    %210 = vmatpush1.msra.mxu0 0.0
    %211 = vmatprep.subr.mxu0 0.0
    %212 = vmatpush1.msra.mxu0 0.0
    %213 = vmatprep.subr.mxu0 0.0
    %214 = vmatpush1.msra.mxu0 0.0
    %215 = vmatprep.subr.mxu0 0.0
    %216 = vmatpush1.msra.mxu0 0.0
    %217 = vmatprep.subr.mxu0 0.0
    %218 = vmatpush1.msra.mxu0 0.0
    %219 = vmatprep.subr.mxu0 0.0
    %220 = vmatpush1.msra.mxu0 0.0
    %221 = vmatprep.subr.mxu0 0.0
    %222 = vmatpush1.msra.mxu0 0.0
    %223 = vmatprep.subr.mxu0 0.0
    %224 = vmatpush1.msra.mxu0 0.0
    %225 = vmatprep.subr.mxu0 0.0
    %226 = vmatpush1.msra.mxu0 0.0
    %227 = vmatprep.subr.mxu0 0.0
    %228 = vmatpush1.msra.mxu0 0.0
    %229 = vmatprep.subr.mxu0 0.0
    %230 = vmatpush1.msra.mxu0 0.0
    %231 = vmatprep.subr.mxu0 0.0
    %232 = vmatpush1.msra.mxu0 0.0
    %233 = vmatprep.subr.mxu0 0.0
    %234 = vmatpush1.msra.mxu0 0.0
    %235 = vmatprep.mubr.f32.mxu0 0.0
    %236 = vmatmul.mubr.f32.gmra.mrb[0].mxu0 %v54
    %v237 = vpop.f32.mrb[0].mxu0
    %v238 = vadd.f32 0.0, %v237
    %v239 = vpop.f32.mrb[0].mxu0
    %v240 = vadd.f32 0.0, %v239
    %241 = vmatprep.mubr.f32.mxu0 0.0
    %242 = vmatmul.mubr.f32.gmra.mrb[0].mxu0 %v57
    %v243 = vpop.f32.mrb[0].mxu0
    %v244 = vadd.f32 0.0, %v243
    %v245 = vpop.f32.mrb[0].mxu0
    %v246 = vadd.f32 0.0, %v245
    %247 = vmatprep.mubr.f32.mxu0 0.0
    %248 = vmatmul.mubr.f32.gmra.mrb[0].mxu0 %v60
    %v249 = vpop.f32.mrb[0].mxu0
    %v250 = vadd.f32 0.0, %v249
    %v251 = vpop.f32.mrb[0].mxu0
    %v252 = vadd.f32 0.0, %v251
    %253 = vmatprep.mubr.f32.mxu0 0.0
    %254 = vmatmul.mubr.f32.gmra.mrb[0].mxu0 %v63
    %v255 = vpop.f32.mrb[0].mxu0
    %v256 = vadd.f32 0.0, %v255
    %v257 = vpop.f32.mrb[0].mxu0
    %v258 = vadd.f32 0.0, %v257
    %259 = vdwg.mxu0
    %s260 = scalar_lea.vmem [#allocation7], 64
    %261 = vst [vmem:[%s260] sm:$0xff] %v238
    %262 = vst [vmem:[%s260 + $0x8] sm:$0xff] %v240
    %263 = vst [vmem:[%s260 + $0x10] sm:$0xff] %v244
    %264 = vst [vmem:[%s260 + $0x18] sm:$0xff] %v246
    %265 = vst [vmem:[%s260 + $0x20] sm:$0xff] %v250
    %266 = vst [vmem:[%s260 + $0x28] sm:$0xff] %v252
    %267 = vst [vmem:[%s260 + $0x30] sm:$0xff] %v256
    %268 = vst [vmem:[%s260 + $0x38] sm:$0xff] %v258
    // Predicated region
    $region18: #{tpu_custom_call.1} parent=1 // pred_check
      _
    $region19: #{tpu_custom_call.1} parent=1 // pred_check_branch
      %270 = sbr.rel (0) target = $region21
    $region20: #{tpu_custom_call.1} parent=1 // pred_region
      %s272 = ssub.s32 2048, 2048
      %273 = vsyncadd [#allocation4], %s272
      %s274 = sshll.u32 [#allocation7], 4
      %s275 = int_to_ptr.vmem [resolvable:$true] %s274
      %280 = dma.vmem_to_hbm [thread:$0]  %s275, 2048, %s2, [#allocation4], 256, 256, 16
    $region21: #{tpu_custom_call.1} parent=1 // pred_fallthru
      _
    // Predicated region
    $region22: #{tpu_custom_call.1} parent=1 // pred_check
      _
    $region23: #{tpu_custom_call.1} parent=1 // pred_check_branch
      %282 = sbr.rel (0) target = $region25
    $region24: #{tpu_custom_call.1} parent=1 // pred_region
      %283 = dma.done [#allocation4], 2048
    $region25: #{tpu_custom_call.1} parent=1 // pred_fallthru
      _
    %284 = vsyncpa [#allocation3], 1
    %285 = vsyncpa [#allocation6], 1
    %286 = vsyncpa [#allocation4], 1

</llo_original>
